<compile_context>
chip_gen: v6e
topology: v6e:2x2x1
jax: 0.10.0
libtpu: 0.0.40
codegen_flags: <defaults>
</compile_context>

<pallas_src>
import jax
import jax.numpy as jnp
from jax import lax
from jax.experimental import pallas as pl
from jax.experimental.pallas import tpu as pltpu

_NEG = -1e30    # ~ -inf padding for extra tag columns (finite, safe in f32/bf16)
_TINY = 1e-37   # clamp for log() so fully-padded lanes stay finite (no NaN/inf)


def _round_up(x, m):
    return (x + m - 1) // m * m


# ---------------------------------------------------------------------------
# Pallas kernel: forward-algorithm log-partition (denominator), streamed over S.
# ---------------------------------------------------------------------------
def _crf_denominator_kernel(em_ref, mask_ref, start_ref, end_ref, etr_ref,
                            out_ref, alpha_ref):
    s_chunk = pl.program_id(1)
    seq_block = em_ref.shape[0]

    etr = etr_ref[...]                      # (T_pad, T_pad) = exp(trans - c), hoisted

    # ---- init at the first sequence chunk: alpha = start + emissions[0] ----
    @pl.when(s_chunk == 0)
    def _():
        alpha_ref[...] = start_ref[...] + em_ref[0].astype(jnp.float32)

    # ---- forward recurrence over the steps of this chunk --------------------
    def body(i, alpha):
        em_i = em_ref[i].astype(jnp.float32)         # (B_tile, T_pad)
        m_i = mask_ref[i]                            # (B_tile, 1)
        # Step 0 of chunk 0 is handled by the init above -> skip the update.
        skip0 = jnp.logical_and(s_chunk == 0, i == 0)

        m = jnp.max(alpha, axis=-1, keepdims=True)   # (B_tile, 1)
        p = jnp.exp(alpha - m)                       # (B_tile, T_pad)
        acc = jnp.dot(p, etr, preferred_element_type=jnp.float32,
                      precision=jax.lax.Precision.HIGHEST)
        stepped = m + jnp.log(jnp.maximum(acc, _TINY)) + em_i
        update = jnp.logical_and(m_i > 0.0, jnp.logical_not(skip0))
        return jnp.where(update, stepped, alpha)

    alpha_ref[...] = lax.fori_loop(0, seq_block, body, alpha_ref[...])

    # ---- finalize at the last chunk: add end transitions, logsumexp ---------
    @pl.when(s_chunk == pl.num_programs(1) - 1)
    def _():
        final = alpha_ref[...] + end_ref[...]
        m = jnp.max(final, axis=-1, keepdims=True)
        denom = m + jnp.log(jnp.sum(jnp.exp(final - m), axis=-1, keepdims=True))
        out_ref[...] = jnp.broadcast_to(denom, out_ref.shape)   # lane-dense store


# ---------------------------------------------------------------------------
# Glue: gold-path score (numerator) — fully vectorized, no sequential loop.
# ---------------------------------------------------------------------------
def _gold_path_score(emissions, tags, mask, start, end, trans):
    S, B, _ = emissions.shape
    maskf = mask.astype(jnp.float32)
    em_tag = jnp.take_along_axis(emissions, tags[..., None], axis=2)[..., 0]   # (S, B)
    score = start[tags[0]] + em_tag[0]                                          # (B,)
    if S > 1:
        tr = trans[tags[:-1], tags[1:]]                                         # (S-1, B)
        score = score + jnp.sum((em_tag[1:] + tr) * maskf[1:], axis=0)
    seq_ends = jnp.sum(mask.astype(jnp.int32), axis=0) - 1                      # (B,)
    last_tags = jnp.take_along_axis(tags, seq_ends[None, :], axis=0)[0]         # (B,)
    return score + end[last_tags]


# ---------------------------------------------------------------------------
# Wrapper
# ---------------------------------------------------------------------------
def crf_forward(emission_scores, tag_sequence, sequence_mask,
                initial_transitions, final_transitions, inter_tag_transitions,
                *, reduction_method="mean", seq_block=128, batch_block=None,
                emissions_dtype=jnp.float32):
    """CRF log-likelihood (time-major inputs). Returns reduced log-likelihood."""
    S, B, T = emission_scores.shape
    assert tag_sequence.shape == (S, B)
    assert sequence_mask.shape == (S, B)

    # torchcrf requirement: every sequence must be valid at its first timestep.
    try:
        first_ok = bool(jnp.all(sequence_mask[0] != 0))
    except Exception:
        first_ok = True   # traced: cannot check concretely
    if not first_ok:
        raise ValueError("sequence_mask[0, :] must be all ones")

    emissions = emission_scores.astype(jnp.float32)
    tags = tag_sequence.astype(jnp.int32)
    maskf = sequence_mask.astype(jnp.float32)
    start = initial_transitions.astype(jnp.float32)
    end = final_transitions.astype(jnp.float32)
    trans = inter_tag_transitions.astype(jnp.float32)

    # ---- numerator: cheap vectorized gathers in glue ------------------------
    numerator = _gold_path_score(emissions, tags, sequence_mask, start, end, trans)

    # ---- tiling parameters ---------------------------------------------------
    T_pad = _round_up(max(T, 128), 128)               # lane width
    if batch_block is None:
        batch_block = min(_round_up(B, 8), 64)        # adaptive MXU batch tile
    assert batch_block % 8 == 0
    B_pad = _round_up(B, batch_block)                 # sublane multiple
    seq_block = min(seq_block, _round_up(S, 8))       # don't over-pad tiny S
    # Keep the double-buffered emission block comfortably inside scoped VMEM.
    while seq_block > 8 and seq_block * batch_block * T_pad * 4 * 2 > (12 << 20):
        seq_block //= 2
    seq_block = max(seq_block, 8)
    S_pad = _round_up(S, seq_block)
    n_b, n_s = B_pad // batch_block, S_pad // seq_block

    # ---- denominator inputs --------------------------------------------------
    # Max-shift the transitions so exp() never overflows; fold the shift c into the
    # emissions of steps >= 1 (step 0 uses start + em[0] directly, no shift needed).
    c = jnp.max(trans)
    # Padding: tag columns get -1e30 (never gain mass); padded seq steps have mask 0.
    em_p = jnp.full((S_pad, B_pad, T_pad), _NEG, emissions_dtype)
    em_p = em_p.at[:S, :B, :T].set(emissions.astype(emissions_dtype))
    if S > 1:
        em_p = em_p.at[1:S, :B, :T].add(c.astype(emissions_dtype))
    mask_p = jnp.zeros((S_pad, B_pad, 1), jnp.float32)
    mask_p = mask_p.at[:S, :B, 0].set(maskf)
    start_p = jnp.full((1, T_pad), _NEG, jnp.float32).at[0, :T].set(start)
    end_p = jnp.full((1, T_pad), _NEG, jnp.float32).at[0, :T].set(end)
    exp_trans = jnp.exp(
        jnp.full((T_pad, T_pad), _NEG, jnp.float32).at[:T, :T].set(trans - c))  # 0 in pads

    grid_spec = pltpu.PrefetchScalarGridSpec(
        num_scalar_prefetch=0,
        grid=(n_b, n_s),
        in_specs=[
            pl.BlockSpec((seq_block, batch_block, T_pad), lambda b, s: (s, b, 0)),
            pl.BlockSpec((seq_block, batch_block, 1), lambda b, s: (s, b, 0)),
            pl.BlockSpec((1, T_pad), lambda b, s: (0, 0)),
            pl.BlockSpec((1, T_pad), lambda b, s: (0, 0)),
            pl.BlockSpec((T_pad, T_pad), lambda b, s: (0, 0)),
        ],
        out_specs=pl.BlockSpec((batch_block, 128), lambda b, s: (b, 0)),
        scratch_shapes=[pltpu.VMEM((batch_block, T_pad), jnp.float32)],
    )

    denom_full = pl.pallas_call(
        _crf_denominator_kernel,
        out_shape=jax.ShapeDtypeStruct((B_pad, 128), jnp.float32),
        grid_spec=grid_spec,
        compiler_params=pltpu.CompilerParams(
            dimension_semantics=("parallel", "arbitrary")),
    )(em_p, mask_p, start_p, end_p, exp_trans)

    denominator = denom_full[:B, 0]
    llh = numerator - denominator

    if reduction_method == "none":
        return llh
    if reduction_method == "sum":
        return jnp.sum(llh)
    if reduction_method == "token_mean":
        return jnp.sum(llh) / jnp.sum(maskf)
    return jnp.mean(llh)   # 'mean' — this module's default


# ---------------------------------------------------------------------------
# Pure-JAX reference (torchcrf semantics) for correctness checking only.
# ---------------------------------------------------------------------------
def crf_forward_ref(emissions, tags, mask, start, end, trans):
    S, B, T = emissions.shape
    maskf = mask.astype(jnp.float32)
    # numerator
    score = start[tags[0]] + emissions[0, jnp.arange(B), tags[0]]
    for i in range(1, S):
        score = score + trans[tags[i - 1], tags[i]] * maskf[i]
        score = score + emissions[i, jnp.arange(B), tags[i]] * maskf[i]
    seq_ends = jnp.sum(mask.astype(jnp.int32), axis=0) - 1
    last_tags = tags[seq_ends, jnp.arange(B)]
    score = score + end[last_tags]
    # denominator
    alpha = start[None, :] + emissions[0]
    for i in range(1, S):
        nxt = jax.nn.logsumexp(alpha[:, :, None] + trans[None, :, :], axis=1)
        nxt = nxt + emissions[i]
        alpha = jnp.where(maskf[i][:, None] > 0, nxt, alpha)
    denom = jax.nn.logsumexp(alpha + end[None, :], axis=1)
    return jnp.mean(score - denom)


if __name__ == "__main__":
    SEQ, BATCH, TAGS = 8, 4, 6

    key = jax.random.PRNGKey(0)
    k1, k2, k3, k4, k5 = jax.random.split(key, 5)

    # Parameter init matching nn.init.uniform_(-0.1, 0.1)
    initial_transitions = jax.random.uniform(k1, (TAGS,), jnp.float32, -0.1, 0.1)
    final_transitions = jax.random.uniform(k2, (TAGS,), jnp.float32, -0.1, 0.1)
    inter_tag_transitions = jax.random.uniform(k3, (TAGS, TAGS), jnp.float32, -0.1, 0.1)

    # Inputs (time-major, batch_first_flag=False)
    emission_scores = jax.random.normal(k4, (SEQ, BATCH, TAGS), jnp.float32)
    tag_sequence = jax.random.randint(k5, (SEQ, BATCH), 0, TAGS, jnp.int32)
    lengths = jnp.array([8, 5, 7, 3], jnp.int32)
    sequence_mask = (jnp.arange(SEQ)[:, None] < lengths[None, :]).astype(jnp.int32)

    result = crf_forward(emission_scores, tag_sequence, sequence_mask,
                         initial_transitions, final_transitions,
                         inter_tag_transitions)
    result = jax.block_until_ready(result)

    expected = crf_forward_ref(emission_scores, tag_sequence, sequence_mask,
                               initial_transitions, final_transitions,
                               inter_tag_transitions)
    assert jnp.allclose(result, expected, rtol=1e-4, atol=1e-4), (result, expected)

    # TODO(synk): decode() (Viterbi k-best with Python-list outputs) is not kernelized.
    print("KERNEL_OK")
</pallas_src>

<mosaic_0001>
module attributes {stable_mosaic.version = 11 : i64} {
  func.func @_crf_denominator_kernel(%arg0: i32, %arg1: i32, %arg2: memref<8x8x128xf32, #tpu.memory_space<vmem>>, %arg3: memref<8x8x1xf32, #tpu.memory_space<vmem>>, %arg4: memref<1x128xf32, #tpu.memory_space<vmem>>, %arg5: memref<1x128xf32, #tpu.memory_space<vmem>>, %arg6: memref<128x128xf32, #tpu.memory_space<vmem>>, %arg7: memref<8x128xf32, #tpu.memory_space<vmem>>, %arg8: memref<8x128xf32, #tpu.memory_space<vmem>>) attributes {dimension_semantics = [#tpu.dimension_semantics<parallel>, #tpu.dimension_semantics<arbitrary>], iteration_bounds = array<i64: 1, 1>, scalar_prefetch = 0 : i64, scratch_operands = 1 : i64, tpu.core_type = #tpu.core_type<tc>, window_params = [{transform_indices = @transform_0, window_bounds = array<i64: 8, 8, 128>}, {transform_indices = @transform_1, window_bounds = array<i64: 8, 8, 1>}, {pipeline_mode = #tpu.pipeline_mode<synchronous>, transform_indices = @transform_2, window_bounds = array<i64: 1, 128>}, {pipeline_mode = #tpu.pipeline_mode<synchronous>, transform_indices = @transform_3, window_bounds = array<i64: 1, 128>}, {pipeline_mode = #tpu.pipeline_mode<synchronous>, transform_indices = @transform_4, window_bounds = array<i64: 128, 128>}, {transform_indices = @transform_5, window_bounds = array<i64: 8, 128>}]} {
    %c0 = arith.constant 0 : index
    %c0_0 = arith.constant 0 : index
    %0 = vector.load %arg6[%c0, %c0_0] : memref<128x128xf32, #tpu.memory_space<vmem>>, vector<128x128xf32>
    %c0_i32 = arith.constant 0 : i32
    %1 = arith.cmpi eq, %arg1, %c0_i32 : i32
    %2 = arith.extui %1 : i1 to i32
    %c0_i32_1 = arith.constant 0 : i32
    %3 = arith.cmpi ne, %2, %c0_i32_1 : i32
    scf.if %3 {
      %c0_10 = arith.constant 0 : index
      %c0_11 = arith.constant 0 : index
      %11 = vector.load %arg4[%c0_10, %c0_11] : memref<1x128xf32, #tpu.memory_space<vmem>>, vector<1x128xf32>
      %c0_12 = arith.constant 0 : index
      %c0_13 = arith.constant 0 : index
      %c0_14 = arith.constant 0 : index
      %12 = vector.load %arg2[%c0_12, %c0_13, %c0_14] : memref<8x8x128xf32, #tpu.memory_space<vmem>>, vector<1x8x128xf32>
      %13 = vector.shape_cast %12 : vector<1x8x128xf32> to vector<8x128xf32>
      %14 = vector.broadcast %11 : vector<1x128xf32> to vector<8x128xf32>
      %15 = arith.addf %14, %13 : vector<8x128xf32>
      %c0_15 = arith.constant 0 : index
      %c0_16 = arith.constant 0 : index
      %16 = vector.load %arg8[%c0_15, %c0_16] : memref<8x128xf32, #tpu.memory_space<vmem>>, vector<8x128xf32>
      tpu.vector_store %arg8[%c0_15, %c0_16], %15 {strides = array<i32>} : memref<8x128xf32, #tpu.memory_space<vmem>>, vector<8x128xf32>,
    } else {
    }
    %c0_2 = arith.constant 0 : index
    %c0_3 = arith.constant 0 : index
    %4 = vector.load %arg8[%c0_2, %c0_3] : memref<8x128xf32, #tpu.memory_space<vmem>>, vector<8x128xf32>
    %c0_i32_4 = arith.constant 0 : i32
    %c8_i32 = arith.constant 8 : i32
    %5 = arith.addi %c0_i32_4, %c8_i32 : i32
    %c1_i32 = arith.constant 1 : i32
    %6 = scf.for %arg9 = %c0_i32_4 to %5 step %c1_i32 iter_args(%arg10 = %4) -> (vector<8x128xf32>)  : i32 {
      %11 = arith.index_cast %arg9 : i32 to index
      %c0_10 = arith.constant 0 : index
      %c0_11 = arith.constant 0 : index
      %12 = vector.load %arg2[%11, %c0_10, %c0_11] : memref<8x8x128xf32, #tpu.memory_space<vmem>>, vector<1x8x128xf32>
      %13 = vector.shape_cast %12 : vector<1x8x128xf32> to vector<8x128xf32>
      %14 = arith.index_cast %arg9 : i32 to index
      %c0_12 = arith.constant 0 : index
      %c0_13 = arith.constant 0 : index
      %15 = vector.load %arg3[%14, %c0_12, %c0_13] : memref<8x8x1xf32, #tpu.memory_space<vmem>>, vector<1x8x1xf32>
      %16 = vector.shape_cast %15 : vector<1x8x1xf32> to vector<8x1xf32>
      %c0_i32_14 = arith.constant 0 : i32
      %17 = arith.cmpi eq, %arg1, %c0_i32_14 : i32
      %c0_i32_15 = arith.constant 0 : i32
      %18 = arith.cmpi eq, %arg9, %c0_i32_15 : i32
      %19 = arith.andi %17, %18 : i1
      %cst = arith.constant dense<0xFF800000> : vector<8xf32>
      %20 = vector.multi_reduction <maximumf>, %arg10, %cst [1] : vector<8x128xf32> to vector<8xf32>
      %21 = vector.shape_cast %20 : vector<8xf32> to vector<8x1xf32>
      %22 = vector.broadcast %21 : vector<8x1xf32> to vector<8x128xf32>
      %23 = arith.subf %arg10, %22 : vector<8x128xf32>
      %24 = math.exp %23 : vector<8x128xf32>
      %cst_16 = arith.constant dense<0.000000e+00> : vector<8x128xf32>
      %25 = tpu.matmul %24, %0, %cst_16 {dimension_numbers = #tpu.dot_dimension_numbers<[1], [0], [0], [1], [0, 0, 1, 1], [], []>, precision = #tpu.contract_precision<fp32>} : vector<8x128xf32>, vector<128x128xf32>, vector<8x128xf32> -> vector<8x128xf32>
      %cst_17 = arith.constant 9.99999991E-38 : f32
      %26 = vector.broadcast %cst_17 : f32 to vector<8x128xf32>
      %27 = arith.maximumf %25, %26 : vector<8x128xf32>
      %28 = math.log %27 : vector<8x128xf32>
      %29 = vector.broadcast %21 : vector<8x1xf32> to vector<8x128xf32>
      %30 = arith.addf %29, %28 : vector<8x128xf32>
      %31 = arith.addf %30, %13 : vector<8x128xf32>
      %cst_18 = arith.constant 0.000000e+00 : f32
      %32 = vector.broadcast %cst_18 : f32 to vector<8x1xf32>
      %33 = arith.cmpf ogt, %16, %32 : vector<8x1xf32>
      %true = arith.constant true
      %34 = arith.xori %19, %true : i1
      %35 = vector.broadcast %34 : i1 to vector<8x1xi1>
      %36 = arith.andi %33, %35 : vector<8x1xi1>
      %37 = vector.shape_cast %36 : vector<8x1xi1> to vector<8x1xi1>
      %38 = vector.broadcast %37 : vector<8x1xi1> to vector<8x128xi1>
      %39 = arith.select %38, %31, %arg10 : vector<8x128xi1>, vector<8x128xf32>
      scf.yield %39 : vector<8x128xf32>
    }
    %c8_i32_5 = arith.constant 8 : i32
    %c0_6 = arith.constant 0 : index
    %c0_7 = arith.constant 0 : index
    %7 = vector.load %arg8[%c0_6, %c0_7] : memref<8x128xf32, #tpu.memory_space<vmem>>, vector<8x128xf32>
    tpu.vector_store %arg8[%c0_6, %c0_7], %6 {strides = array<i32>} : memref<8x128xf32, #tpu.memory_space<vmem>>, vector<8x128xf32>,
    %c0_i32_8 = arith.constant 0 : i32
    %8 = arith.cmpi eq, %arg1, %c0_i32_8 : i32
    %9 = arith.extui %8 : i1 to i32
    %c0_i32_9 = arith.constant 0 : i32
    %10 = arith.cmpi ne, %9, %c0_i32_9 : i32
    scf.if %10 {
      %c0_10 = arith.constant 0 : index
      %c0_11 = arith.constant 0 : index
      %11 = vector.load %arg8[%c0_10, %c0_11] : memref<8x128xf32, #tpu.memory_space<vmem>>, vector<8x128xf32>
      %c0_12 = arith.constant 0 : index
      %c0_13 = arith.constant 0 : index
      %12 = vector.load %arg5[%c0_12, %c0_13] : memref<1x128xf32, #tpu.memory_space<vmem>>, vector<1x128xf32>
      %13 = vector.broadcast %12 : vector<1x128xf32> to vector<8x128xf32>
      %14 = arith.addf %11, %13 : vector<8x128xf32>
      %cst = arith.constant dense<0xFF800000> : vector<8xf32>
      %15 = vector.multi_reduction <maximumf>, %14, %cst [1] : vector<8x128xf32> to vector<8xf32>
      %16 = vector.shape_cast %15 : vector<8xf32> to vector<8x1xf32>
      %17 = vector.broadcast %16 : vector<8x1xf32> to vector<8x128xf32>
      %18 = arith.subf %14, %17 : vector<8x128xf32>
      %19 = math.exp %18 : vector<8x128xf32>
      %cst_14 = arith.constant dense<0.000000e+00> : vector<8xf32>
      %20 = vector.multi_reduction <add>, %19, %cst_14 [1] : vector<8x128xf32> to vector<8xf32>
      %21 = vector.shape_cast %20 : vector<8xf32> to vector<8x1xf32>
      %22 = math.log %21 : vector<8x1xf32>
      %23 = arith.addf %16, %22 : vector<8x1xf32>
      %24 = vector.shape_cast %23 : vector<8x1xf32> to vector<8x1xf32>
      %25 = vector.broadcast %24 : vector<8x1xf32> to vector<8x128xf32>
      %c0_15 = arith.constant 0 : index
      %c0_16 = arith.constant 0 : index
      %26 = vector.load %arg7[%c0_15, %c0_16] : memref<8x128xf32, #tpu.memory_space<vmem>>, vector<8x128xf32>
      tpu.vector_store %arg7[%c0_15, %c0_16], %25 {strides = array<i32>} : memref<8x128xf32, #tpu.memory_space<vmem>>, vector<8x128xf32>,
    } else {
    }
    return
  }
  func.func @transform_0(%arg0: i32, %arg1: i32) -> (i32, i32, i32) {
    %c0_i32 = arith.constant 0 : i32
    %c0_i32_0 = arith.constant 0 : i32
    return %arg1, %arg0, %c0_i32 : i32, i32, i32
  }
  func.func @transform_1(%arg0: i32, %arg1: i32) -> (i32, i32, i32) {
    %c0_i32 = arith.constant 0 : i32
    %c0_i32_0 = arith.constant 0 : i32
    return %arg1, %arg0, %c0_i32 : i32, i32, i32
  }
  func.func @transform_2(%arg0: i32, %arg1: i32) -> (i32, i32) {
    %c0_i32 = arith.constant 0 : i32
    %c0_i32_0 = arith.constant 0 : i32
    %c0_i32_1 = arith.constant 0 : i32
    return %c0_i32, %c0_i32_0 : i32, i32
  }
  func.func @transform_3(%arg0: i32, %arg1: i32) -> (i32, i32) {
    %c0_i32 = arith.constant 0 : i32
    %c0_i32_0 = arith.constant 0 : i32
    %c0_i32_1 = arith.constant 0 : i32
    return %c0_i32, %c0_i32_0 : i32, i32
  }
  func.func @transform_4(%arg0: i32, %arg1: i32) -> (i32, i32) {
    %c0_i32 = arith.constant 0 : i32
    %c0_i32_0 = arith.constant 0 : i32
    %c0_i32_1 = arith.constant 0 : i32
    return %c0_i32, %c0_i32_0 : i32, i32
  }
  func.func @transform_5(%arg0: i32, %arg1: i32) -> (i32, i32) {
    %c0_i32 = arith.constant 0 : i32
    %c0_i32_0 = arith.constant 0 : i32
    return %arg0, %c0_i32 : i32, i32
  }
}

</mosaic_0001>

<llo_original>
// kernel: tpu_custom_call.1
$region0: #{tpu_custom_call.1}
  #allocation0 [shape = 'u32[]', space=smem, size = 0x4, offset = 0x4, fixed_abs, tag = 'smem constant byte address 0x4 - core index']
  #allocation1 [shape = 'u32[144,128]{1,0:T(1,128)}', space=vmem, size = 0x12000, scoped, tag = 'internal scratch']
  #allocation2 [shape = 'f32[8,128]{1,0:T(8,128)}', space=vmem, size = 0x1000, scoped, tag = 'scratch operand']
  %s0 = inlined_call_operand.vmem [shape: f32[8,8,128], index: 0, kind: input, shape index: {}]
  %s1 = inlined_call_operand.vmem [shape: f32[8,8,1], index: 1, kind: input, shape index: {}]
  %s2 = inlined_call_operand.vmem [shape: f32[1,128], index: 2, kind: input, shape index: {}]
  %s3 = inlined_call_operand.vmem [shape: f32[1,128], index: 3, kind: input, shape index: {}]
  %s4 = inlined_call_operand.hbm [shape: f32[128,128], index: 4, kind: input, shape index: {}]
  %s5 = inlined_call_operand.hbm [shape: f32[8,128], index: 5, kind: output, shape index: {}]
  %s6 = sld [smem:[#allocation0]]
  $region49: #{tpu_custom_call.1} parent=0
    _
  %s8 = ssub.s32 1, %s6
  %s9 = scalar_select 0, %s8, %s6
  $region1: #{tpu_custom_call.1} parent=0
    #allocation3 [shape = 'u8[65536]{0}', space=vmem, size = 0x10000, scoped, tag = 'input window, operand 4, single buffered']
    #allocation4 [shape = 's32[1]{0}', space=sflag, size = 0x4, scoped, tag = 'scoped memory for tpu_custom_call.1']
    #allocation5 [shape = 's32[1]{0}', space=sflag, size = 0x4, scoped, tag = 'scoped memory for tpu_custom_call.1']
    #allocation6 [shape = 'u8[4096]{0}', space=vmem, size = 0x1000, scoped, tag = 'output window, operand 0, single buffered']
    %10 = vsyncpa [#allocation4], 0
    %11 = vsyncpa [#allocation5], 0
    // Predicated region
    $region2: #{tpu_custom_call.1} parent=1 // pred_check
      _
    $region3: #{tpu_custom_call.1} parent=1 // pred_check_branch
      %13 = sbr.rel (0) target = $region5
    $region4: #{tpu_custom_call.1} parent=1 // pred_region
      _
    $region5: #{tpu_custom_call.1} parent=1 // pred_fallthru
      _
    // Predicated region
    $region6: #{tpu_custom_call.1} parent=1 // pred_check
      _
    $region7: #{tpu_custom_call.1} parent=1 // pred_check_branch
      %15 = sbr.rel (0) target = $region9
    $region8: #{tpu_custom_call.1} parent=1 // pred_region
      _
    $region9: #{tpu_custom_call.1} parent=1 // pred_fallthru
      _
    // Predicated region
    $region10: #{tpu_custom_call.1} parent=1 // pred_check
      _
    $region11: #{tpu_custom_call.1} parent=1 // pred_check_branch
      %17 = sbr.rel (0) target = $region13
    $region12: #{tpu_custom_call.1} parent=1 // pred_region
      _
    $region13: #{tpu_custom_call.1} parent=1 // pred_fallthru
      _
    // Predicated region
    $region14: #{tpu_custom_call.1} parent=1 // pred_check
      _
    $region15: #{tpu_custom_call.1} parent=1 // pred_check_branch
      %19 = sbr.rel (0) target = $region17
    $region16: #{tpu_custom_call.1} parent=1 // pred_region
      _
    $region17: #{tpu_custom_call.1} parent=1 // pred_fallthru
      _
    // Predicated region
    $region18: #{tpu_custom_call.1} parent=1 // pred_check
      _
    $region19: #{tpu_custom_call.1} parent=1 // pred_check_branch
      %21 = sbr.rel (0) target = $region21
    $region20: #{tpu_custom_call.1} parent=1 // pred_region
      %s23 = ssub.s32 2048, 2048
      %24 = vsyncadd [#allocation4], %s23
      %s25 = sshll.u32 [#allocation3], 4
      %s26 = int_to_ptr.vmem [resolvable:$true] %s25
      %31 = dma.hbm_to_vmem [thread:$0]  %s4, 2048, %s26, [#allocation4], 128, 128, 8
    $region21: #{tpu_custom_call.1} parent=1 // pred_fallthru
      _
    // Predicated region
    $region22: #{tpu_custom_call.1} parent=1 // pred_check
      _
    $region23: #{tpu_custom_call.1} parent=1 // pred_check_branch
      %33 = sbr.rel (0) target = $region25
    $region24: #{tpu_custom_call.1} parent=1 // pred_region
      %34 = dma.done [#allocation4], 2048
    $region25: #{tpu_custom_call.1} parent=1 // pred_fallthru
      _
    %v35 = vld [vmem:[#allocation3] sm:$0xff]
    %v36 = vld [vmem:[#allocation3 + $0x8] sm:$0xff]
    %v37 = vld [vmem:[#allocation3 + $0x10] sm:$0xff]
    %v38 = vld [vmem:[#allocation3 + $0x18] sm:$0xff]
    %v39 = vld [vmem:[#allocation3 + $0x20] sm:$0xff]
    %v40 = vld [vmem:[#allocation3 + $0x28] sm:$0xff]
    %v41 = vld [vmem:[#allocation3 + $0x30] sm:$0xff]
    %v42 = vld [vmem:[#allocation3 + $0x38] sm:$0xff]
    %v43 = vld [vmem:[#allocation3 + $0x40] sm:$0xff]
    %v44 = vld [vmem:[#allocation3 + $0x48] sm:$0xff]
    %v45 = vld [vmem:[#allocation3 + $0x50] sm:$0xff]
    %v46 = vld [vmem:[#allocation3 + $0x58] sm:$0xff]
    %v47 = vld [vmem:[#allocation3 + $0x60] sm:$0xff]
    %v48 = vld [vmem:[#allocation3 + $0x68] sm:$0xff]
    %v49 = vld [vmem:[#allocation3 + $0x70] sm:$0xff]
    %v50 = vld [vmem:[#allocation3 + $0x78] sm:$0xff]
    %p51 = scmp.eq.s32.totalorder 0, 0
    // Predicated region
    $region26: #{tpu_custom_call.1} parent=1 // pred_check
      %p52 = pneg %p51
    $region27: #{tpu_custom_call.1} parent=1 // pred_check_branch
      %54 = sbr.rel (%p52) target = $region29
    $region28: #{tpu_custom_call.1} parent=1 // pred_region
      %v55 = vld [vmem:[%s2] sm:$0x1]
      %v56 = vld [vmem:[%s0] sm:$0xff]
      %v58 = vlaneseq
      %v59 = vshrl.u32 %v58, 7
      %v60 = vsub.s32 0, %v59
      %v61 = vrot.slane %v55, %v60
      %v63 = vadd.f32 %v61, %v56
      %64 = vst [vmem:[#allocation2] sm:$0xff] %v63
    $region29: #{tpu_custom_call.1} parent=1 // pred_fallthru
      _
    %v65 = vld [vmem:[#allocation2] sm:$0xff]
    loop: start=0, step=1, limit=8
    $region30: #{tpu_custom_call.1} parent=1 // loop_pre_header
      _
    $region31: #{tpu_custom_call.1} parent=1 // loop_header
      %s67 = sphi 0, %s71
      %p68 = scmp.ge.s32.totalorder %s67, 8
      %v72 = vphi %v65, %v743
    $region32: #{tpu_custom_call.1} parent=1 // loop_header_branch
      %70 = sbr.rel (%p68) target = $region36
    $region33: #{tpu_custom_call.1} parent=1 // loop_body
      %s73 = smul.u32 %s67, 8
      %s74 = scalar_lea.vmem %s0, %s73
      %v75 = vld [vmem:[%s74] sm:$0xff]
      %s76 = scalar_lea.vmem %s1, %s73
      %v77 = vld [vmem:[%s76] sm:$0xff]
      %p78 = scmp.eq.s32.totalorder %s67, 0
      %p79 = pnand %p51, %p78
      %p80 = pneg %p79
      %81 = vmax.xlane.f32.xlu0 %v72
      %v82 = vpop.xlane.xlu0 %81
      %v83 = vsub.f32 %v72, %v82
      %v84 = vmul.f32 %v83, 1.442695
      %v85 = vpow.pop %v84
      %86 = vmatprep.subr.mxu0 0.0
      %v87 = vand.u32 %v50, 4294901760
      %88 = vmatpush1.msra.mxu0 %v87
      %89 = vmatprep.subr.mxu0 0.0
      %v90 = vand.u32 %v49, 4294901760
      %91 = vmatpush1.msra.mxu0 %v90
      %92 = vmatprep.subr.mxu0 0.0
      %v93 = vand.u32 %v48, 4294901760
      %94 = vmatpush1.msra.mxu0 %v93
      %95 = vmatprep.subr.mxu0 0.0
      %v96 = vand.u32 %v47, 4294901760
      %97 = vmatpush1.msra.mxu0 %v96
      %98 = vmatprep.subr.mxu0 0.0
      %v99 = vand.u32 %v46, 4294901760
      %100 = vmatpush1.msra.mxu0 %v99
      %101 = vmatprep.subr.mxu0 0.0
      %v102 = vand.u32 %v45, 4294901760
      %103 = vmatpush1.msra.mxu0 %v102
      %104 = vmatprep.subr.mxu0 0.0
      %v105 = vand.u32 %v44, 4294901760
      %106 = vmatpush1.msra.mxu0 %v105
      %107 = vmatprep.subr.mxu0 0.0
      %v108 = vand.u32 %v43, 4294901760
      %109 = vmatpush1.msra.mxu0 %v108
      %110 = vmatprep.subr.mxu0 0.0
      %v111 = vand.u32 %v42, 4294901760
      %112 = vmatpush1.msra.mxu0 %v111
      %113 = vmatprep.subr.mxu0 0.0
      %v114 = vand.u32 %v41, 4294901760
      %115 = vmatpush1.msra.mxu0 %v114
      %116 = vmatprep.subr.mxu0 0.0
      %v117 = vand.u32 %v40, 4294901760
      %118 = vmatpush1.msra.mxu0 %v117
      %119 = vmatprep.subr.mxu0 0.0
      %v120 = vand.u32 %v39, 4294901760
      %121 = vmatpush1.msra.mxu0 %v120
      %122 = vmatprep.subr.mxu0 0.0
      %v123 = vand.u32 %v38, 4294901760
      %124 = vmatpush1.msra.mxu0 %v123
      %125 = vmatprep.subr.mxu0 0.0
      %v126 = vand.u32 %v37, 4294901760
      %127 = vmatpush1.msra.mxu0 %v126
      %128 = vmatprep.subr.mxu0 0.0
      %v129 = vand.u32 %v36, 4294901760
      %130 = vmatpush1.msra.mxu0 %v129
      %131 = vmatprep.subr.mxu0 0.0
      %v132 = vand.u32 %v35, 4294901760
      %133 = vmatpush1.msra.mxu0 %v132
      %134 = vmatprep.subr.mxu0 0.0
      %135 = vmatpush2.msra.mxu0 0.0
      %136 = vmatprep.subr.mxu0 0.0
      %137 = vmatpush2.msra.mxu0 0.0
      %138 = vmatprep.subr.mxu0 0.0
      %139 = vmatpush2.msra.mxu0 0.0
      %140 = vmatprep.subr.mxu0 0.0
      %141 = vmatpush2.msra.mxu0 0.0
      %142 = vmatprep.subr.mxu0 0.0
      %143 = vmatpush2.msra.mxu0 0.0
      %144 = vmatprep.subr.mxu0 0.0
      %145 = vmatpush2.msra.mxu0 0.0
      %146 = vmatprep.subr.mxu0 0.0
      %147 = vmatpush2.msra.mxu0 0.0
      %148 = vmatprep.subr.mxu0 0.0
      %149 = vmatpush2.msra.mxu0 0.0
      %150 = vmatprep.subr.mxu0 0.0
      %151 = vmatpush2.msra.mxu0 0.0
      %152 = vmatprep.subr.mxu0 0.0
      %153 = vmatpush2.msra.mxu0 0.0
      %154 = vmatprep.subr.mxu0 0.0
      %155 = vmatpush2.msra.mxu0 0.0
      %156 = vmatprep.subr.mxu0 0.0
      %157 = vmatpush2.msra.mxu0 0.0
      %158 = vmatprep.subr.mxu0 0.0
      %159 = vmatpush2.msra.mxu0 0.0
      %160 = vmatprep.subr.mxu0 0.0
      %161 = vmatpush2.msra.mxu0 0.0
      %162 = vmatprep.subr.mxu0 0.0
      %163 = vmatpush2.msra.mxu0 0.0
      %164 = vmatprep.subr.mxu0 0.0
      %165 = vmatpush2.msra.mxu0 0.0
      %166 = vmatprep.mubr.f32.mxu0 0.0
      %v167 = vand.u32 %v85, 4294901760
      %v168 = vsub.f32 %v85, %v167
      %v169 = vand.u32 %v168, 4294901760
      %v170 = vsub.f32 %v168, %v169
      %v171 = vand.u32 %v170, 4294901760
      %172 = vmatmul.mubr.f32.gmra.mxu0 %v171
      %v173 = vpop.f32.mrf.mxu0
      %v174 = vadd.f32 0.0, %v173
      %v175 = vpop.f32.mrf.mxu0
      %176 = vdwg.mxu0
      %177 = vmatprep.subr.mxu0 0.0
      %v178 = vand.u32 %v50, 4294901760
      %v179 = vsub.f32 %v50, %v178
      %v180 = vand.u32 %v179, 4294901760
      %v181 = vsub.f32 %v179, %v180
      %v182 = vand.u32 %v181, 4294901760
      %183 = vmatpush1.msra.mxu0 %v182
      %184 = vmatprep.subr.mxu0 0.0
      %v185 = vand.u32 %v49, 4294901760
      %v186 = vsub.f32 %v49, %v185
      %v187 = vand.u32 %v186, 4294901760
      %v188 = vsub.f32 %v186, %v187
      %v189 = vand.u32 %v188, 4294901760
      %190 = vmatpush1.msra.mxu0 %v189
      %191 = vmatprep.subr.mxu0 0.0
      %v192 = vand.u32 %v48, 4294901760
      %v193 = vsub.f32 %v48, %v192
      %v194 = vand.u32 %v193, 4294901760
      %v195 = vsub.f32 %v193, %v194
      %v196 = vand.u32 %v195, 4294901760
      %197 = vmatpush1.msra.mxu0 %v196
      %198 = vmatprep.subr.mxu0 0.0
      %v199 = vand.u32 %v47, 4294901760
      %v200 = vsub.f32 %v47, %v199
      %v201 = vand.u32 %v200, 4294901760
      %v202 = vsub.f32 %v200, %v201
      %v203 = vand.u32 %v202, 4294901760
      %204 = vmatpush1.msra.mxu0 %v203
      %205 = vmatprep.subr.mxu0 0.0
      %v206 = vand.u32 %v46, 4294901760
      %v207 = vsub.f32 %v46, %v206
      %v208 = vand.u32 %v207, 4294901760
      %v209 = vsub.f32 %v207, %v208
      %v210 = vand.u32 %v209, 4294901760
      %211 = vmatpush1.msra.mxu0 %v210
      %212 = vmatprep.subr.mxu0 0.0
      %v213 = vand.u32 %v45, 4294901760
      %v214 = vsub.f32 %v45, %v213
      %v215 = vand.u32 %v214, 4294901760
      %v216 = vsub.f32 %v214, %v215
      %v217 = vand.u32 %v216, 4294901760
      %218 = vmatpush1.msra.mxu0 %v217
      %219 = vmatprep.subr.mxu0 0.0
      %v220 = vand.u32 %v44, 4294901760
      %v221 = vsub.f32 %v44, %v220
      %v222 = vand.u32 %v221, 4294901760
      %v223 = vsub.f32 %v221, %v222
      %v224 = vand.u32 %v223, 4294901760
      %225 = vmatpush1.msra.mxu0 %v224
      %226 = vmatprep.subr.mxu0 0.0
      %v227 = vand.u32 %v43, 4294901760
      %v228 = vsub.f32 %v43, %v227
      %v229 = vand.u32 %v228, 4294901760
      %v230 = vsub.f32 %v228, %v229
      %v231 = vand.u32 %v230, 4294901760
      %232 = vmatpush1.msra.mxu0 %v231
      %233 = vmatprep.subr.mxu0 0.0
      %v234 = vand.u32 %v42, 4294901760
      %v235 = vsub.f32 %v42, %v234
      %v236 = vand.u32 %v235, 4294901760
      %v237 = vsub.f32 %v235, %v236
      %v238 = vand.u32 %v237, 4294901760
      %239 = vmatpush1.msra.mxu0 %v238
      %240 = vmatprep.subr.mxu0 0.0
      %v241 = vand.u32 %v41, 4294901760
      %v242 = vsub.f32 %v41, %v241
      %v243 = vand.u32 %v242, 4294901760
      %v244 = vsub.f32 %v242, %v243
      %v245 = vand.u32 %v244, 4294901760
      %246 = vmatpush1.msra.mxu0 %v245
      %247 = vmatprep.subr.mxu0 0.0
      %v248 = vand.u32 %v40, 4294901760
      %v249 = vsub.f32 %v40, %v248
      %v250 = vand.u32 %v249, 4294901760
      %v251 = vsub.f32 %v249, %v250
      %v252 = vand.u32 %v251, 4294901760
      %253 = vmatpush1.msra.mxu0 %v252
      %254 = vmatprep.subr.mxu0 0.0
      %v255 = vand.u32 %v39, 4294901760
      %v256 = vsub.f32 %v39, %v255
      %v257 = vand.u32 %v256, 4294901760
      %v258 = vsub.f32 %v256, %v257
      %v259 = vand.u32 %v258, 4294901760
      %260 = vmatpush1.msra.mxu0 %v259
      %261 = vmatprep.subr.mxu0 0.0
      %v262 = vand.u32 %v38, 4294901760
      %v263 = vsub.f32 %v38, %v262
      %v264 = vand.u32 %v263, 4294901760
      %v265 = vsub.f32 %v263, %v264
      %v266 = vand.u32 %v265, 4294901760
      %267 = vmatpush1.msra.mxu0 %v266
      %268 = vmatprep.subr.mxu0 0.0
      %v269 = vand.u32 %v37, 4294901760
      %v270 = vsub.f32 %v37, %v269
      %v271 = vand.u32 %v270, 4294901760
      %v272 = vsub.f32 %v270, %v271
      %v273 = vand.u32 %v272, 4294901760
      %274 = vmatpush1.msra.mxu0 %v273
      %275 = vmatprep.subr.mxu0 0.0
      %v276 = vand.u32 %v36, 4294901760
      %v277 = vsub.f32 %v36, %v276
      %v278 = vand.u32 %v277, 4294901760
      %v279 = vsub.f32 %v277, %v278
      %v280 = vand.u32 %v279, 4294901760
      %281 = vmatpush1.msra.mxu0 %v280
      %282 = vmatprep.subr.mxu0 0.0
      %v283 = vand.u32 %v35, 4294901760
      %v284 = vsub.f32 %v35, %v283
      %v285 = vand.u32 %v284, 4294901760
      %v286 = vsub.f32 %v284, %v285
      %v287 = vand.u32 %v286, 4294901760
      %288 = vmatpush1.msra.mxu0 %v287
      %289 = vmatprep.subr.mxu0 0.0
      %290 = vmatpush2.msra.mxu0 0.0
      %291 = vmatprep.subr.mxu0 0.0
      %292 = vmatpush2.msra.mxu0 0.0
      %293 = vmatprep.subr.mxu0 0.0
      %294 = vmatpush2.msra.mxu0 0.0
      %295 = vmatprep.subr.mxu0 0.0
      %296 = vmatpush2.msra.mxu0 0.0
      %297 = vmatprep.subr.mxu0 0.0
      %298 = vmatpush2.msra.mxu0 0.0
      %299 = vmatprep.subr.mxu0 0.0
      %300 = vmatpush2.msra.mxu0 0.0
      %301 = vmatprep.subr.mxu0 0.0
      %302 = vmatpush2.msra.mxu0 0.0
      %303 = vmatprep.subr.mxu0 0.0
      %304 = vmatpush2.msra.mxu0 0.0
      %305 = vmatprep.subr.mxu0 0.0
      %306 = vmatpush2.msra.mxu0 0.0
      %307 = vmatprep.subr.mxu0 0.0
      %308 = vmatpush2.msra.mxu0 0.0
      %309 = vmatprep.subr.mxu0 0.0
      %310 = vmatpush2.msra.mxu0 0.0
      %311 = vmatprep.subr.mxu0 0.0
      %312 = vmatpush2.msra.mxu0 0.0
      %313 = vmatprep.subr.mxu0 0.0
      %314 = vmatpush2.msra.mxu0 0.0
      %315 = vmatprep.subr.mxu0 0.0
      %316 = vmatpush2.msra.mxu0 0.0
      %317 = vmatprep.subr.mxu0 0.0
      %318 = vmatpush2.msra.mxu0 0.0
      %319 = vmatprep.subr.mxu0 0.0
      %320 = vmatpush2.msra.mxu0 0.0
      %321 = vmatprep.mubr.f32.mxu0 0.0
      %v322 = vand.u32 %v85, 4294901760
      %323 = vmatmul.mubr.f32.gmra.mxu0 %v322
      %v324 = vpop.f32.mrf.mxu0
      %v325 = vadd.f32 %v174, %v324
      %v326 = vpop.f32.mrf.mxu0
      %327 = vdwg.mxu0
      %328 = vmatprep.subr.mxu0 0.0
      %v329 = vand.u32 %v50, 4294901760
      %v330 = vsub.f32 %v50, %v329
      %331 = vmatpush1.msra.mxu0 %v330
      %332 = vmatprep.subr.mxu0 0.0
      %v333 = vand.u32 %v49, 4294901760
      %v334 = vsub.f32 %v49, %v333
      %335 = vmatpush1.msra.mxu0 %v334
      %336 = vmatprep.subr.mxu0 0.0
      %v337 = vand.u32 %v48, 4294901760
      %v338 = vsub.f32 %v48, %v337
      %339 = vmatpush1.msra.mxu0 %v338
      %340 = vmatprep.subr.mxu0 0.0
      %v341 = vand.u32 %v47, 4294901760
      %v342 = vsub.f32 %v47, %v341
      %343 = vmatpush1.msra.mxu0 %v342
      %344 = vmatprep.subr.mxu0 0.0
      %v345 = vand.u32 %v46, 4294901760
      %v346 = vsub.f32 %v46, %v345
      %347 = vmatpush1.msra.mxu0 %v346
      %348 = vmatprep.subr.mxu0 0.0
      %v349 = vand.u32 %v45, 4294901760
      %v350 = vsub.f32 %v45, %v349
      %351 = vmatpush1.msra.mxu0 %v350
      %352 = vmatprep.subr.mxu0 0.0
      %v353 = vand.u32 %v44, 4294901760
      %v354 = vsub.f32 %v44, %v353
      %355 = vmatpush1.msra.mxu0 %v354
      %356 = vmatprep.subr.mxu0 0.0
      %v357 = vand.u32 %v43, 4294901760
      %v358 = vsub.f32 %v43, %v357
      %359 = vmatpush1.msra.mxu0 %v358
      %360 = vmatprep.subr.mxu0 0.0
      %v361 = vand.u32 %v42, 4294901760
      %v362 = vsub.f32 %v42, %v361
      %363 = vmatpush1.msra.mxu0 %v362
      %364 = vmatprep.subr.mxu0 0.0
      %v365 = vand.u32 %v41, 4294901760
      %v366 = vsub.f32 %v41, %v365
      %367 = vmatpush1.msra.mxu0 %v366
      %368 = vmatprep.subr.mxu0 0.0
      %v369 = vand.u32 %v40, 4294901760
      %v370 = vsub.f32 %v40, %v369
      %371 = vmatpush1.msra.mxu0 %v370
      %372 = vmatprep.subr.mxu0 0.0
      %v373 = vand.u32 %v39, 4294901760
      %v374 = vsub.f32 %v39, %v373
      %375 = vmatpush1.msra.mxu0 %v374
      %376 = vmatprep.subr.mxu0 0.0
      %v377 = vand.u32 %v38, 4294901760
      %v378 = vsub.f32 %v38, %v377
      %379 = vmatpush1.msra.mxu0 %v378
      %380 = vmatprep.subr.mxu0 0.0
      %v381 = vand.u32 %v37, 4294901760
      %v382 = vsub.f32 %v37, %v381
      %383 = vmatpush1.msra.mxu0 %v382
      %384 = vmatprep.subr.mxu0 0.0
      %v385 = vand.u32 %v36, 4294901760
      %v386 = vsub.f32 %v36, %v385
      %387 = vmatpush1.msra.mxu0 %v386
      %388 = vmatprep.subr.mxu0 0.0
      %v389 = vand.u32 %v35, 4294901760
      %v390 = vsub.f32 %v35, %v389
      %391 = vmatpush1.msra.mxu0 %v390
      %392 = vmatprep.subr.mxu0 0.0
      %393 = vmatpush2.msra.mxu0 0.0
      %394 = vmatprep.subr.mxu0 0.0
      %395 = vmatpush2.msra.mxu0 0.0
      %396 = vmatprep.subr.mxu0 0.0
      %397 = vmatpush2.msra.mxu0 0.0
      %398 = vmatprep.subr.mxu0 0.0
      %399 = vmatpush2.msra.mxu0 0.0
      %400 = vmatprep.subr.mxu0 0.0
      %401 = vmatpush2.msra.mxu0 0.0
      %402 = vmatprep.subr.mxu0 0.0
      %403 = vmatpush2.msra.mxu0 0.0
      %404 = vmatprep.subr.mxu0 0.0
      %405 = vmatpush2.msra.mxu0 0.0
      %406 = vmatprep.subr.mxu0 0.0
      %407 = vmatpush2.msra.mxu0 0.0
      %408 = vmatprep.subr.mxu0 0.0
      %409 = vmatpush2.msra.mxu0 0.0
      %410 = vmatprep.subr.mxu0 0.0
      %411 = vmatpush2.msra.mxu0 0.0
      %412 = vmatprep.subr.mxu0 0.0
      %413 = vmatpush2.msra.mxu0 0.0
      %414 = vmatprep.subr.mxu0 0.0
      %415 = vmatpush2.msra.mxu0 0.0
      %416 = vmatprep.subr.mxu0 0.0
      %417 = vmatpush2.msra.mxu0 0.0
      %418 = vmatprep.subr.mxu0 0.0
      %419 = vmatpush2.msra.mxu0 0.0
      %420 = vmatprep.subr.mxu0 0.0
      %421 = vmatpush2.msra.mxu0 0.0
      %422 = vmatprep.subr.mxu0 0.0
      %423 = vmatpush2.msra.mxu0 0.0
      %424 = vmatprep.mubr.f32.mxu0 0.0
      %v425 = vand.u32 %v85, 4294901760
      %v426 = vsub.f32 %v85, %v425
      %427 = vmatmul.mubr.f32.gmra.mxu0 %v426
      %v428 = vpop.f32.mrf.mxu0
      %v429 = vadd.f32 %v325, %v428
      %v430 = vpop.f32.mrf.mxu0
      %431 = vdwg.mxu0
      %432 = vmatprep.subr.mxu0 0.0
      %v433 = vand.u32 %v50, 4294901760
      %434 = vmatpush1.msra.mxu0 %v433
      %435 = vmatprep.subr.mxu0 0.0
      %v436 = vand.u32 %v49, 4294901760
      %437 = vmatpush1.msra.mxu0 %v436
      %438 = vmatprep.subr.mxu0 0.0
      %v439 = vand.u32 %v48, 4294901760
      %440 = vmatpush1.msra.mxu0 %v439
      %441 = vmatprep.subr.mxu0 0.0
      %v442 = vand.u32 %v47, 4294901760
      %443 = vmatpush1.msra.mxu0 %v442
      %444 = vmatprep.subr.mxu0 0.0
      %v445 = vand.u32 %v46, 4294901760
      %446 = vmatpush1.msra.mxu0 %v445
      %447 = vmatprep.subr.mxu0 0.0
      %v448 = vand.u32 %v45, 4294901760
      %449 = vmatpush1.msra.mxu0 %v448
      %450 = vmatprep.subr.mxu0 0.0
      %v451 = vand.u32 %v44, 4294901760
      %452 = vmatpush1.msra.mxu0 %v451
      %453 = vmatprep.subr.mxu0 0.0
      %v454 = vand.u32 %v43, 4294901760
      %455 = vmatpush1.msra.mxu0 %v454
      %456 = vmatprep.subr.mxu0 0.0
      %v457 = vand.u32 %v42, 4294901760
      %458 = vmatpush1.msra.mxu0 %v457
      %459 = vmatprep.subr.mxu0 0.0
      %v460 = vand.u32 %v41, 4294901760
      %461 = vmatpush1.msra.mxu0 %v460
      %462 = vmatprep.subr.mxu0 0.0
      %v463 = vand.u32 %v40, 4294901760
      %464 = vmatpush1.msra.mxu0 %v463
      %465 = vmatprep.subr.mxu0 0.0
      %v466 = vand.u32 %v39, 4294901760
      %467 = vmatpush1.msra.mxu0 %v466
      %468 = vmatprep.subr.mxu0 0.0
      %v469 = vand.u32 %v38, 4294901760
      %470 = vmatpush1.msra.mxu0 %v469
      %471 = vmatprep.subr.mxu0 0.0
      %v472 = vand.u32 %v37, 4294901760
      %473 = vmatpush1.msra.mxu0 %v472
      %474 = vmatprep.subr.mxu0 0.0
      %v475 = vand.u32 %v36, 4294901760
      %476 = vmatpush1.msra.mxu0 %v475
      %477 = vmatprep.subr.mxu0 0.0
      %v478 = vand.u32 %v35, 4294901760
      %479 = vmatpush1.msra.mxu0 %v478
      %480 = vmatprep.subr.mxu0 0.0
      %481 = vmatpush2.msra.mxu0 0.0
      %482 = vmatprep.subr.mxu0 0.0
      %483 = vmatpush2.msra.mxu0 0.0
      %484 = vmatprep.subr.mxu0 0.0
      %485 = vmatpush2.msra.mxu0 0.0
      %486 = vmatprep.subr.mxu0 0.0
      %487 = vmatpush2.msra.mxu0 0.0
      %488 = vmatprep.subr.mxu0 0.0
      %489 = vmatpush2.msra.mxu0 0.0
      %490 = vmatprep.subr.mxu0 0.0
      %491 = vmatpush2.msra.mxu0 0.0
      %492 = vmatprep.subr.mxu0 0.0
      %493 = vmatpush2.msra.mxu0 0.0
      %494 = vmatprep.subr.mxu0 0.0
      %495 = vmatpush2.msra.mxu0 0.0
      %496 = vmatprep.subr.mxu0 0.0
      %497 = vmatpush2.msra.mxu0 0.0
      %498 = vmatprep.subr.mxu0 0.0
      %499 = vmatpush2.msra.mxu0 0.0
      %500 = vmatprep.subr.mxu0 0.0
      %501 = vmatpush2.msra.mxu0 0.0
      %502 = vmatprep.subr.mxu0 0.0
      %503 = vmatpush2.msra.mxu0 0.0
      %504 = vmatprep.subr.mxu0 0.0
      %505 = vmatpush2.msra.mxu0 0.0
      %506 = vmatprep.subr.mxu0 0.0
      %507 = vmatpush2.msra.mxu0 0.0
      %508 = vmatprep.subr.mxu0 0.0
      %509 = vmatpush2.msra.mxu0 0.0
      %510 = vmatprep.subr.mxu0 0.0
      %511 = vmatpush2.msra.mxu0 0.0
      %512 = vmatprep.mubr.f32.mxu0 0.0
      %v513 = vand.u32 %v85, 4294901760
      %v514 = vsub.f32 %v85, %v513
      %v515 = vand.u32 %v514, 4294901760
      %516 = vmatmul.mubr.f32.gmra.mxu0 %v515
      %v517 = vpop.f32.mrf.mxu0
      %v518 = vadd.f32 %v429, %v517
      %v519 = vpop.f32.mrf.mxu0
      %520 = vdwg.mxu0
      %521 = vmatprep.subr.mxu0 0.0
      %v522 = vand.u32 %v50, 4294901760
      %v523 = vsub.f32 %v50, %v522
      %v524 = vand.u32 %v523, 4294901760
      %525 = vmatpush1.msra.mxu0 %v524
      %526 = vmatprep.subr.mxu0 0.0
      %v527 = vand.u32 %v49, 4294901760
      %v528 = vsub.f32 %v49, %v527
      %v529 = vand.u32 %v528, 4294901760
      %530 = vmatpush1.msra.mxu0 %v529
      %531 = vmatprep.subr.mxu0 0.0
      %v532 = vand.u32 %v48, 4294901760
      %v533 = vsub.f32 %v48, %v532
      %v534 = vand.u32 %v533, 4294901760
      %535 = vmatpush1.msra.mxu0 %v534
      %536 = vmatprep.subr.mxu0 0.0
      %v537 = vand.u32 %v47, 4294901760
      %v538 = vsub.f32 %v47, %v537
      %v539 = vand.u32 %v538, 4294901760
      %540 = vmatpush1.msra.mxu0 %v539
      %541 = vmatprep.subr.mxu0 0.0
      %v542 = vand.u32 %v46, 4294901760
      %v543 = vsub.f32 %v46, %v542
      %v544 = vand.u32 %v543, 4294901760
      %545 = vmatpush1.msra.mxu0 %v544
      %546 = vmatprep.subr.mxu0 0.0
      %v547 = vand.u32 %v45, 4294901760
      %v548 = vsub.f32 %v45, %v547
      %v549 = vand.u32 %v548, 4294901760
      %550 = vmatpush1.msra.mxu0 %v549
      %551 = vmatprep.subr.mxu0 0.0
      %v552 = vand.u32 %v44, 4294901760
      %v553 = vsub.f32 %v44, %v552
      %v554 = vand.u32 %v553, 4294901760
      %555 = vmatpush1.msra.mxu0 %v554
      %556 = vmatprep.subr.mxu0 0.0
      %v557 = vand.u32 %v43, 4294901760
      %v558 = vsub.f32 %v43, %v557
      %v559 = vand.u32 %v558, 4294901760
      %560 = vmatpush1.msra.mxu0 %v559
      %561 = vmatprep.subr.mxu0 0.0
      %v562 = vand.u32 %v42, 4294901760
      %v563 = vsub.f32 %v42, %v562
      %v564 = vand.u32 %v563, 4294901760
      %565 = vmatpush1.msra.mxu0 %v564
      %566 = vmatprep.subr.mxu0 0.0
      %v567 = vand.u32 %v41, 4294901760
      %v568 = vsub.f32 %v41, %v567
      %v569 = vand.u32 %v568, 4294901760
      %570 = vmatpush1.msra.mxu0 %v569
      %571 = vmatprep.subr.mxu0 0.0
      %v572 = vand.u32 %v40, 4294901760
      %v573 = vsub.f32 %v40, %v572
      %v574 = vand.u32 %v573, 4294901760
      %575 = vmatpush1.msra.mxu0 %v574
      %576 = vmatprep.subr.mxu0 0.0
      %v577 = vand.u32 %v39, 4294901760
      %v578 = vsub.f32 %v39, %v577
      %v579 = vand.u32 %v578, 4294901760
      %580 = vmatpush1.msra.mxu0 %v579
      %581 = vmatprep.subr.mxu0 0.0
      %v582 = vand.u32 %v38, 4294901760
      %v583 = vsub.f32 %v38, %v582
      %v584 = vand.u32 %v583, 4294901760
      %585 = vmatpush1.msra.mxu0 %v584
      %586 = vmatprep.subr.mxu0 0.0
      %v587 = vand.u32 %v37, 4294901760
      %v588 = vsub.f32 %v37, %v587
      %v589 = vand.u32 %v588, 4294901760
      %590 = vmatpush1.msra.mxu0 %v589
      %591 = vmatprep.subr.mxu0 0.0
      %v592 = vand.u32 %v36, 4294901760
      %v593 = vsub.f32 %v36, %v592
      %v594 = vand.u32 %v593, 4294901760
      %595 = vmatpush1.msra.mxu0 %v594
      %596 = vmatprep.subr.mxu0 0.0
      %v597 = vand.u32 %v35, 4294901760
      %v598 = vsub.f32 %v35, %v597
      %v599 = vand.u32 %v598, 4294901760
      %600 = vmatpush1.msra.mxu0 %v599
      %601 = vmatprep.subr.mxu0 0.0
      %602 = vmatpush2.msra.mxu0 0.0
      %603 = vmatprep.subr.mxu0 0.0
      %604 = vmatpush2.msra.mxu0 0.0
      %605 = vmatprep.subr.mxu0 0.0
      %606 = vmatpush2.msra.mxu0 0.0
      %607 = vmatprep.subr.mxu0 0.0
      %608 = vmatpush2.msra.mxu0 0.0
      %609 = vmatprep.subr.mxu0 0.0
      %610 = vmatpush2.msra.mxu0 0.0
      %611 = vmatprep.subr.mxu0 0.0
      %612 = vmatpush2.msra.mxu0 0.0
      %613 = vmatprep.subr.mxu0 0.0
      %614 = vmatpush2.msra.mxu0 0.0
      %615 = vmatprep.subr.mxu0 0.0
      %616 = vmatpush2.msra.mxu0 0.0
      %617 = vmatprep.subr.mxu0 0.0
      %618 = vmatpush2.msra.mxu0 0.0
      %619 = vmatprep.subr.mxu0 0.0
      %620 = vmatpush2.msra.mxu0 0.0
      %621 = vmatprep.subr.mxu0 0.0
      %622 = vmatpush2.msra.mxu0 0.0
      %623 = vmatprep.subr.mxu0 0.0
      %624 = vmatpush2.msra.mxu0 0.0
      %625 = vmatprep.subr.mxu0 0.0
      %626 = vmatpush2.msra.mxu0 0.0
      %627 = vmatprep.subr.mxu0 0.0
      %628 = vmatpush2.msra.mxu0 0.0
      %629 = vmatprep.subr.mxu0 0.0
      %630 = vmatpush2.msra.mxu0 0.0
      %631 = vmatprep.subr.mxu0 0.0
      %632 = vmatpush2.msra.mxu0 0.0
      %633 = vmatprep.mubr.f32.mxu0 0.0
      %v634 = vand.u32 %v85, 4294901760
      %635 = vmatmul.mubr.f32.gmra.mxu0 %v634
      %v636 = vpop.f32.mrf.mxu0
      %v637 = vadd.f32 %v518, %v636
      %v638 = vpop.f32.mrf.mxu0
      %639 = vdwg.mxu0
      %640 = vmatprep.subr.mxu0 0.0
      %v641 = vand.u32 %v50, 4294901760
      %642 = vmatpush1.msra.mxu0 %v641
      %643 = vmatprep.subr.mxu0 0.0
      %v644 = vand.u32 %v49, 4294901760
      %645 = vmatpush1.msra.mxu0 %v644
      %646 = vmatprep.subr.mxu0 0.0
      %v647 = vand.u32 %v48, 4294901760
      %648 = vmatpush1.msra.mxu0 %v647
      %649 = vmatprep.subr.mxu0 0.0
      %v650 = vand.u32 %v47, 4294901760
      %651 = vmatpush1.msra.mxu0 %v650
      %652 = vmatprep.subr.mxu0 0.0
      %v653 = vand.u32 %v46, 4294901760
      %654 = vmatpush1.msra.mxu0 %v653
      %655 = vmatprep.subr.mxu0 0.0
      %v656 = vand.u32 %v45, 4294901760
      %657 = vmatpush1.msra.mxu0 %v656
      %658 = vmatprep.subr.mxu0 0.0
      %v659 = vand.u32 %v44, 4294901760
      %660 = vmatpush1.msra.mxu0 %v659
      %661 = vmatprep.subr.mxu0 0.0
      %v662 = vand.u32 %v43, 4294901760
      %663 = vmatpush1.msra.mxu0 %v662
      %664 = vmatprep.subr.mxu0 0.0
      %v665 = vand.u32 %v42, 4294901760
      %666 = vmatpush1.msra.mxu0 %v665
      %667 = vmatprep.subr.mxu0 0.0
      %v668 = vand.u32 %v41, 4294901760
      %669 = vmatpush1.msra.mxu0 %v668
      %670 = vmatprep.subr.mxu0 0.0
      %v671 = vand.u32 %v40, 4294901760
      %672 = vmatpush1.msra.mxu0 %v671
      %673 = vmatprep.subr.mxu0 0.0
      %v674 = vand.u32 %v39, 4294901760
      %675 = vmatpush1.msra.mxu0 %v674
      %676 = vmatprep.subr.mxu0 0.0
      %v677 = vand.u32 %v38, 4294901760
      %678 = vmatpush1.msra.mxu0 %v677
      %679 = vmatprep.subr.mxu0 0.0
      %v680 = vand.u32 %v37, 4294901760
      %681 = vmatpush1.msra.mxu0 %v680
      %682 = vmatprep.subr.mxu0 0.0
      %v683 = vand.u32 %v36, 4294901760
      %684 = vmatpush1.msra.mxu0 %v683
      %685 = vmatprep.subr.mxu0 0.0
      %v686 = vand.u32 %v35, 4294901760
      %687 = vmatpush1.msra.mxu0 %v686
      %688 = vmatprep.subr.mxu0 0.0
      %689 = vmatpush2.msra.mxu0 0.0
      %690 = vmatprep.subr.mxu0 0.0
      %691 = vmatpush2.msra.mxu0 0.0
      %692 = vmatprep.subr.mxu0 0.0
      %693 = vmatpush2.msra.mxu0 0.0
      %694 = vmatprep.subr.mxu0 0.0
      %695 = vmatpush2.msra.mxu0 0.0
      %696 = vmatprep.subr.mxu0 0.0
      %697 = vmatpush2.msra.mxu0 0.0
      %698 = vmatprep.subr.mxu0 0.0
      %699 = vmatpush2.msra.mxu0 0.0
      %700 = vmatprep.subr.mxu0 0.0
      %701 = vmatpush2.msra.mxu0 0.0
      %702 = vmatprep.subr.mxu0 0.0
      %703 = vmatpush2.msra.mxu0 0.0
      %704 = vmatprep.subr.mxu0 0.0
      %705 = vmatpush2.msra.mxu0 0.0
      %706 = vmatprep.subr.mxu0 0.0
      %707 = vmatpush2.msra.mxu0 0.0
      %708 = vmatprep.subr.mxu0 0.0
      %709 = vmatpush2.msra.mxu0 0.0
      %710 = vmatprep.subr.mxu0 0.0
      %711 = vmatpush2.msra.mxu0 0.0
      %712 = vmatprep.subr.mxu0 0.0
      %713 = vmatpush2.msra.mxu0 0.0
      %714 = vmatprep.subr.mxu0 0.0
      %715 = vmatpush2.msra.mxu0 0.0
      %716 = vmatprep.subr.mxu0 0.0
      %717 = vmatpush2.msra.mxu0 0.0
      %718 = vmatprep.subr.mxu0 0.0
      %719 = vmatpush2.msra.mxu0 0.0
      %720 = vmatprep.mubr.f32.mxu0 0.0
      %v721 = vand.u32 %v85, 4294901760
      %722 = vmatmul.mubr.f32.gmra.mxu0 %v721
      %v723 = vpop.f32.mrf.mxu0
      %v724 = vadd.f32 %v637, %v723
      %v725 = vpop.f32.mrf.mxu0
      %726 = vdwg.mxu0
      %v727 = vmax.f32 %v724, 1e-37
      %v728 = vlog2.pop %v727
      %v729 = vmul.f32 %v728, 0.6931472
      %v730 = vadd.f32 %v82, %v729
      %v731 = vadd.f32 %v730, %v75
      %vm732 = vcmp.gt.f32.partialorder %v77, 0.0
      %p733 = pneg %p80
      %s734 = scalar_select %p733, 1, 0
      %v735 = vstv %s734
      %vm736 = vcmp.eq.s32.totalorder %v735, 1
      %vm737 = vmand %vm732, %vm736
      %v738 = vsel %vm737, 1, 0
      %739 = vset.pattern.permute.xlu0 0
      %740 = vperm.xlu0 %739, %v738
      %v741 = vpop.permute.xlu0 %740
      %vm742 = vcmp.eq.s32.totalorder %v741, 1
      %v743 = vsel %vm742, %v731, %v72
    $region34: #{tpu_custom_call.1} parent=1 // loop_footer
      %s71 = sadd.s32 1, %s67
    $region35: #{tpu_custom_call.1} parent=1 // loop_footer_branch
      %66 = sbr.rel target = $region31
    $region36: #{tpu_custom_call.1} parent=1 // loop_exit
      _
    %744 = vst [vmem:[#allocation2] sm:$0xff] %v72
    // Predicated region
    $region37: #{tpu_custom_call.1} parent=1 // pred_check
      %p745 = pneg %p51
    $region38: #{tpu_custom_call.1} parent=1 // pred_check_branch
      %747 = sbr.rel (%p745) target = $region40
    $region39: #{tpu_custom_call.1} parent=1 // pred_region
      %v748 = vld [vmem:[#allocation2] sm:$0xff]
      %v749 = vld [vmem:[%s3] sm:$0x1]
      %v751 = vlaneseq
      %v752 = vshrl.u32 %v751, 7
      %v753 = vsub.s32 0, %v752
      %v754 = vrot.slane %v749, %v753
      %v756 = vadd.f32 %v748, %v754
      %757 = vmax.xlane.f32.xlu0 %v756
      %v758 = vpop.xlane.xlu0 %757
      %v759 = vsub.f32 %v756, %v758
      %v760 = vmul.f32 %v759, 1.442695
      %v761 = vpow.pop %v760
      %762 = vadd.xlane.f32.xlu0 %v761
      %v763 = vpop.xlane.xlu0 %762
      %v764 = vlog2.pop %v763
      %v765 = vmul.f32 %v764, 0.6931472
      %v766 = vadd.f32 %v758, %v765
      %767 = vst [vmem:[#allocation6] sm:$0xff] %v766
    $region40: #{tpu_custom_call.1} parent=1 // pred_fallthru
      _
    // Predicated region
    $region41: #{tpu_custom_call.1} parent=1 // pred_check
      _
    $region42: #{tpu_custom_call.1} parent=1 // pred_check_branch
      %769 = sbr.rel (0) target = $region44
    $region43: #{tpu_custom_call.1} parent=1 // pred_region
      %s771 = ssub.s32 128, 128
      %772 = vsyncadd [#allocation5], %s771
      %s774 = sshll.u32 [#allocation6], 4
      %s775 = int_to_ptr.vmem [resolvable:$true] %s774
      %777 = dma.vmem_to_hbm [thread:$0]  %s775, 128, %s5, [#allocation5]
    $region44: #{tpu_custom_call.1} parent=1 // pred_fallthru
      _
    // Predicated region
    $region45: #{tpu_custom_call.1} parent=1 // pred_check
      _
    $region46: #{tpu_custom_call.1} parent=1 // pred_check_branch
      %779 = sbr.rel (0) target = $region48
    $region47: #{tpu_custom_call.1} parent=1 // pred_region
      %780 = dma.done [#allocation5], 128
    $region48: #{tpu_custom_call.1} parent=1 // pred_fallthru
      _
    %781 = vsyncpa [#allocation4], 1
    %782 = vsyncpa [#allocation5], 1

</llo_original>
